<compile_context>
chip_gen: v7x
topology: tpu7x:2x2x1
jax: 0.10.0
libtpu: 0.0.40
codegen_flags: <defaults>
</compile_context>

<pallas_src>
import jax
import jax.numpy as jnp
from jax.experimental import pallas as pl
from jax.experimental.pallas import tpu as pltpu


def _fused_conv_kernel(w_ref, b_ref, cols_ref, o_ref):
    # w_ref:    (2*Cout, K)       pre-summed & Cout-concatenated conv weights
    # b_ref:    (2*Cout, 1)       pre-summed & concatenated biases
    # cols_ref: (K, TILE_M)       im2col patches, lane-dense along M
    # o_ref:    (2*Cout, TILE_M)  fused output tile
    y = jnp.dot(w_ref[...], cols_ref[...], preferred_element_type=jnp.float32)
    o_ref[...] = (y + b_ref[...]).astype(o_ref.dtype)


def _pick_tile_m(M):
    # Largest multiple-of-128 tile (<=2048, safe for v7x's 64 MiB VMEM) that
    # divides M and leaves >=2 grid steps for megacore sharding.
    for t in (2048, 1024, 512, 256, 128):
        if M % t == 0 and M // t >= 2:
            return t
    for t in (2048, 1024, 512, 256, 128):
        if M % t == 0:
            return t
    return M  # fallback: single full block


def pattern_a_forward(x, weights, biases):
    """x: (N, Cin, H, W) f32; weights: (4, Cout, Cin, 3, 3); biases: (4, Cout).

    Returns (2N, Cout, H, W) = cat(conv1(x), conv2(x)) + cat(conv3(x), conv4(x)).
    """
    N, Cin, H, W = x.shape
    Cout = weights.shape[1]
    KH = KW = 3
    M = N * H * W
    K = KH * KW * Cin
    C2 = 2 * Cout

    # --- glue: zero-pad (NCHW), build im2col patches as (K, M), lane-dense M ---
    # tap order k = (dy*KW + dx)*Cin + c ; m = n*H*W + h*W + w
    x_pad = jnp.pad(x, ((0, 0), (0, 0), (1, 1), (1, 1)))
    x_t = jnp.transpose(x_pad, (1, 0, 2, 3))                     # (Cin, N, Hp, Wp)
    cols_t = jnp.concatenate(
        [x_t[:, :, dy:dy + H, dx:dx + W].reshape(Cin, M)
         for dy in range(KH) for dx in range(KW)],
        axis=0)                                                  # (K, M)

    # --- glue: weights -> (Cout, K) matching the (dy, dx, c) tap order, then
    #     pre-sum the conv pairs and concatenate the two halves along Cout ---
    wmat = jnp.transpose(weights, (0, 1, 3, 4, 2)).reshape(4, Cout, K)
    w_all = jnp.concatenate([wmat[0] + wmat[2],                  # half 0: conv1+conv3
                             wmat[1] + wmat[3]], axis=0)         # half 1: conv2+conv4
    b_all = jnp.concatenate([biases[0] + biases[2],
                             biases[1] + biases[3]], axis=0).reshape(C2, 1)

    tile_m = _pick_tile_m(M)
    grid = (pl.cdiv(M, tile_m),)

    cost = pl.CostEstimate(
        flops=2 * M * K * C2,
        transcendentals=0,
        bytes_accessed=4 * (K * M + C2 * M + C2 * K + C2),
    )

    out = pl.pallas_call(
        _fused_conv_kernel,
        out_shape=jax.ShapeDtypeStruct((C2, M), jnp.float32),
        grid=grid,
        in_specs=[
            pl.BlockSpec((C2, K), lambda m: (0, 0)),      # weights: resident
            pl.BlockSpec((C2, 1), lambda m: (0, 0)),      # bias: resident
            pl.BlockSpec((K, tile_m), lambda m: (0, m)),  # patches: tiled over M
        ],
        out_specs=pl.BlockSpec((C2, tile_m), lambda m: (0, m)),
        compiler_params=pltpu.CompilerParams(dimension_semantics=("parallel",)),
        cost_estimate=cost,
    )(w_all, b_all, cols_t)

    # --- glue: (2*Cout, M) -> (2N, Cout, H, W) matching the batch-dim cat order ---
    out = out.reshape(2, Cout, N, H, W)
    out = jnp.transpose(out, (0, 2, 1, 3, 4)).reshape(2 * N, Cout, H, W)
    return out


def _reference(x, weights, biases):
    def conv(w, b):
        y = jax.lax.conv_general_dilated(
            x, w, window_strides=(1, 1), padding=((1, 1), (1, 1)),
            dimension_numbers=('NCHW', 'OIHW', 'NCHW'))
        return y + b[None, :, None, None]
    y1, y2, y3, y4 = (conv(weights[i], biases[i]) for i in range(4))
    return jnp.concatenate([y1, y2], axis=0) + jnp.concatenate([y3, y4], axis=0)


if __name__ == "__main__":
    key = jax.random.PRNGKey(0)
    k_x, k_w, k_b = jax.random.split(key, 3)

    N, Cin, H, W, Cout = 2, 3, 16, 16, 16
    x = jax.random.normal(k_x, (N, Cin, H, W), dtype=jnp.float32)

    # Deterministic parameter init (uniform in [-1/sqrt(fan_in), 1/sqrt(fan_in)],
    # same spirit as torch.nn.Conv2d default init).
    fan_in = Cin * 3 * 3
    bound = 1.0 / jnp.sqrt(jnp.float32(fan_in))
    weights = jax.random.uniform(k_w, (4, Cout, Cin, 3, 3),
                                 minval=-bound, maxval=bound, dtype=jnp.float32)
    biases = jax.random.uniform(k_b, (4, Cout),
                                minval=-bound, maxval=bound, dtype=jnp.float32)

    out = jax.jit(pattern_a_forward)(x, weights, biases)
    out = jax.block_until_ready(out)

    ref = _reference(x, weights, biases)
    assert out.shape == (2 * N, Cout, H, W), out.shape
    assert jnp.allclose(out, ref, atol=1e-4, rtol=1e-4), float(jnp.max(jnp.abs(out - ref)))

    print("KERNEL_OK")
</pallas_src>

<mosaic_0001>
module attributes {stable_mosaic.version = 11 : i64} {
  func.func @_fused_conv_kernel(%arg0: i32, %arg1: memref<32x27xf32, #tpu.memory_space<vmem>>, %arg2: memref<32x1xf32, #tpu.memory_space<vmem>>, %arg3: memref<27x256xf32, #tpu.memory_space<vmem>>, %arg4: memref<32x256xf32, #tpu.memory_space<vmem>>) attributes {dimension_semantics = [#tpu.dimension_semantics<parallel>], iteration_bounds = array<i64: 2>, scalar_prefetch = 0 : i64, scratch_operands = 0 : i64, tpu.core_type = #tpu.core_type<tc>, window_params = [{pipeline_mode = #tpu.pipeline_mode<synchronous>, transform_indices = @transform_0, window_bounds = array<i64: 32, 27>}, {pipeline_mode = #tpu.pipeline_mode<synchronous>, transform_indices = @transform_1, window_bounds = array<i64: 32, 1>}, {transform_indices = @transform_2, window_bounds = array<i64: 27, 256>}, {transform_indices = @transform_3, window_bounds = array<i64: 32, 256>}]} {
    %c0 = arith.constant 0 : index
    %c0_0 = arith.constant 0 : index
    %0 = vector.load %arg1[%c0, %c0_0] : memref<32x27xf32, #tpu.memory_space<vmem>>, vector<32x27xf32>
    %c0_1 = arith.constant 0 : index
    %c0_2 = arith.constant 0 : index
    %1 = vector.load %arg3[%c0_1, %c0_2] : memref<27x256xf32, #tpu.memory_space<vmem>>, vector<27x256xf32>
    %cst = arith.constant dense<0.000000e+00> : vector<32x256xf32>
    %2 = tpu.matmul %0, %1, %cst {dimension_numbers = #tpu.dot_dimension_numbers<[1], [0], [0], [1], [0, 0, 1, 1], [], []>} : vector<32x27xf32>, vector<27x256xf32>, vector<32x256xf32> -> vector<32x256xf32>
    %c0_3 = arith.constant 0 : index
    %c0_4 = arith.constant 0 : index
    %3 = vector.load %arg2[%c0_3, %c0_4] : memref<32x1xf32, #tpu.memory_space<vmem>>, vector<32x1xf32>
    %4 = vector.broadcast %3 : vector<32x1xf32> to vector<32x256xf32>
    %5 = arith.addf %2, %4 : vector<32x256xf32>
    %c0_5 = arith.constant 0 : index
    %c0_6 = arith.constant 0 : index
    %6 = vector.load %arg4[%c0_5, %c0_6] : memref<32x256xf32, #tpu.memory_space<vmem>>, vector<32x256xf32>
    tpu.vector_store %arg4[%c0_5, %c0_6], %5 {strides = array<i32>} : memref<32x256xf32, #tpu.memory_space<vmem>>, vector<32x256xf32>,
    return
  }
  func.func @transform_0(%arg0: i32) -> (i32, i32) {
    %c0_i32 = arith.constant 0 : i32
    %c0_i32_0 = arith.constant 0 : i32
    %c0_i32_1 = arith.constant 0 : i32
    return %c0_i32, %c0_i32_0 : i32, i32
  }
  func.func @transform_1(%arg0: i32) -> (i32, i32) {
    %c0_i32 = arith.constant 0 : i32
    %c0_i32_0 = arith.constant 0 : i32
    %c0_i32_1 = arith.constant 0 : i32
    return %c0_i32, %c0_i32_0 : i32, i32
  }
  func.func @transform_2(%arg0: i32) -> (i32, i32) {
    %c0_i32 = arith.constant 0 : i32
    %c0_i32_0 = arith.constant 0 : i32
    return %c0_i32, %arg0 : i32, i32
  }
  func.func @transform_3(%arg0: i32) -> (i32, i32) {
    %c0_i32 = arith.constant 0 : i32
    %c0_i32_0 = arith.constant 0 : i32
    return %c0_i32, %arg0 : i32, i32
  }
}

</mosaic_0001>

<llo_original>
// kernel: squeeze.8
$region0: #{squeeze.8}
  %s0 = inlined_call_operand.vmem [shape: f32[1,16,3,3,3], index: 0, kind: input, shape index: {}]
  %s1 = inlined_call_operand.vmem [shape: f32[16,27], index: 1, kind: output, shape index: {}]
  $region1: #{squeeze.8} parent=0
    #allocation0 [shape = 'u8[36864]{0}', space=vmem, size = 0x9000, scoped, tag = 'scoped mem for input reshape']
    %s3 = sshllo.u32 0, 4
    %s4 = smul.addr 4, 8
    %s5 = scalar_lea.vmem %s0, %s4
    %v6 = vld [vmem:[%s5] sm:%s3]
    %s7 = scalar_lea.vmem [#allocation0], 64
    %8 = vst [vmem:[%s7] sm:%s3] %v6
    %s9 = smul.addr 4, 7
    %s10 = scalar_lea.vmem %s0, %s9
    %v11 = vld [vmem:[%s10] sm:%s3]
    %s12 = scalar_lea.vmem [#allocation0], 56
    %13 = vst [vmem:[%s12] sm:%s3] %v11
    %s14 = smul.addr 4, 6
    %s15 = scalar_lea.vmem %s0, %s14
    %v16 = vld [vmem:[%s15] sm:%s3]
    %s17 = scalar_lea.vmem [#allocation0], 48
    %18 = vst [vmem:[%s17] sm:%s3] %v16
    %s19 = smul.addr 4, 5
    %s20 = scalar_lea.vmem %s0, %s19
    %v21 = vld [vmem:[%s20] sm:%s3]
    %s22 = scalar_lea.vmem [#allocation0], 40
    %23 = vst [vmem:[%s22] sm:%s3] %v21
    %s24 = smul.addr 4, 4
    %s25 = scalar_lea.vmem %s0, %s24
    %v26 = vld [vmem:[%s25] sm:%s3]
    %s27 = scalar_lea.vmem [#allocation0], 32
    %28 = vst [vmem:[%s27] sm:%s3] %v26
    %s29 = smul.addr 4, 3
    %s30 = scalar_lea.vmem %s0, %s29
    %v31 = vld [vmem:[%s30] sm:%s3]
    %s32 = scalar_lea.vmem [#allocation0], 24
    %33 = vst [vmem:[%s32] sm:%s3] %v31
    %s34 = smul.addr 4, 2
    %s35 = scalar_lea.vmem %s0, %s34
    %v36 = vld [vmem:[%s35] sm:%s3]
    %s37 = scalar_lea.vmem [#allocation0], 16
    %38 = vst [vmem:[%s37] sm:%s3] %v36
    %s39 = scalar_lea.vmem %s0, 4
    %v40 = vld [vmem:[%s39] sm:%s3]
    %s41 = scalar_lea.vmem [#allocation0], 8
    %42 = vst [vmem:[%s41] sm:%s3] %v40
    %v43 = vld [vmem:[%s0] sm:%s3]
    %44 = vst [vmem:[#allocation0] sm:%s3] %v43
    %v45 = vld [vmem:[#allocation0] sm:$0x7]
    %vm46 = vcmask 130048
    %47 = vst.msk [vmem:[%s1] sm:$0x7] %vm46, %v45
    %s48 = scalar_lea.vmem [#allocation0], 8
    %v49 = vld [vmem:[%s48] sm:$0x7]
    %vm50 = vcmask 130048
    %s51 = scalar_lea.vmem %s1, 3
    %52 = vst.msk [vmem:[%s51] sm:$0x7] %vm50, %v49
    %s53 = scalar_lea.vmem [#allocation0], 16
    %v54 = vld [vmem:[%s53] sm:$0x7]
    %vm55 = vcmask 130048
    %s56 = scalar_lea.vmem %s1, 6
    %57 = vst.msk [vmem:[%s56] sm:$0x7] %vm55, %v54
    %s58 = scalar_lea.vmem [#allocation0], 24
    %v59 = vld [vmem:[%s58] sm:$0x7]
    %vm60 = vcmask 130048
    %s61 = scalar_lea.vmem %s1, 9
    %62 = vst.msk [vmem:[%s61] sm:$0x7] %vm60, %v59
    %s63 = scalar_lea.vmem [#allocation0], 32
    %v64 = vld [vmem:[%s63] sm:$0x7]
    %vm65 = vcmask 130048
    %s66 = scalar_lea.vmem %s1, 12
    %67 = vst.msk [vmem:[%s66] sm:$0x7] %vm65, %v64
    %s68 = scalar_lea.vmem [#allocation0], 40
    %v69 = vld [vmem:[%s68] sm:$0x7]
    %vm70 = vcmask 130048
    %s71 = scalar_lea.vmem %s1, 15
    %72 = vst.msk [vmem:[%s71] sm:$0x7] %vm70, %v69
    %s73 = scalar_lea.vmem [#allocation0], 48
    %v74 = vld [vmem:[%s73] sm:$0x7]
    %vm75 = vcmask 130048
    %s76 = scalar_lea.vmem %s1, 18
    %77 = vst.msk [vmem:[%s76] sm:$0x7] %vm75, %v74
    %s78 = scalar_lea.vmem [#allocation0], 56
    %v79 = vld [vmem:[%s78] sm:$0x7]
    %vm80 = vcmask 130048
    %s81 = scalar_lea.vmem %s1, 21
    %82 = vst.msk [vmem:[%s81] sm:$0x7] %vm80, %v79
    %s83 = scalar_lea.vmem [#allocation0], 64
    %v84 = vld [vmem:[%s83] sm:$0x7]
    %vm85 = vcmask 130048
    %s86 = scalar_lea.vmem %s1, 24
    %87 = vst.msk [vmem:[%s86] sm:$0x7] %vm85, %v84

// kernel: pattern_a_forward.1
$region0: #{pattern_a_forward.1}
  #allocation0 [shape = 'u32[]', space=smem, size = 0x4, offset = 0x4, fixed_abs, tag = 'smem constant byte address 0x4 - core index']
  #allocation1 [shape = 'u32[144,128]{1,0:T(1,128)}', space=vmem, size = 0x12000, scoped, tag = 'internal scratch']
  %s0 = inlined_call_operand.vmem [shape: f32[32,27], index: 0, kind: input, shape index: {}]
  %s1 = inlined_call_operand.vmem [shape: f32[32,1], index: 1, kind: input, shape index: {}]
  %s2 = inlined_call_operand.vmem [shape: f32[27,512], index: 2, kind: input, shape index: {}]
  %s3 = inlined_call_operand.vmem [shape: f32[32,512], index: 3, kind: output, shape index: {}]
  %s4 = sld [smem:[#allocation0]]
  $region87: #{pattern_a_forward.1} parent=0
    _
  %s6 = ssub.s32 1, %s4
  %s7 = scalar_select 0, %s6, %s4
  $region1: #{pattern_a_forward.1} parent=0
    #allocation2 [shape = 'u8[65536]{0}', space=vmem, size = 0x10000, scoped, tag = 'input window, operand 2']
    #allocation3 [shape = 'u8[65536]{0}', space=vmem, size = 0x10000, scoped, tag = 'output window, operand 0']
    loop: start=0, step=1, limit=4
    $region2: #{pattern_a_forward.1} parent=1 // loop_pre_header
      _
    $region3: #{pattern_a_forward.1} parent=1 // loop_header
      %s9 = sphi 0, %s13
      %p10 = scmp.ge.s32.totalorder %s9, 4
      %s17 = sphi 0, %s17
      %s19 = sphi 0, %s17
      %s20 = sphi 0, %s19
      %s34 = sphi 0, %s20
      %s38 = sphi 0, %s38
      %s40 = sphi 0, %s38
      %s41 = sphi 0, %s40
      %s55 = sphi 0, %s41
      %s61 = sphi 0, %s63
      %s64 = sphi 0, %s61
      %s65 = sphi 0, %s64
      %s81 = sphi 0, %s65
      %s87 = sphi 0, %s89
      %s90 = sphi 0, %s87
      %s91 = sphi 0, %s90
      %s107 = sphi 0, %s91
    $region4: #{pattern_a_forward.1} parent=1 // loop_header_branch
      %12 = sbr.rel (%p10) target = $region8
    $region5: #{pattern_a_forward.1} parent=1 // loop_body
      %s14 = ssub.s32 %s9, 1
      %s15 = ssub.s32 %s9, 2
      %s16 = sadd.s32 %s9, 1
      %s18 = sadd.s32 %s17, 1
      %p21 = scmp.eq.s32.totalorder %s9, 1
      %p22 = scmp.ne.s32.totalorder %s17, %s19
      %p23 = scmp.eq.s32.totalorder %s9, 0
      %p24 = por %p22, %p23
      %p25 = scmp.ne.s32.totalorder %s17, %s19
      %p26 = scmp.eq.s32.totalorder %s14, 1
      %p27 = por %p25, %p26
      %p28 = scmp.ne.s32.totalorder %s19, %s20
      %p29 = scmp.eq.s32.totalorder %s14, 0
      %p30 = por %p28, %p29
      %p31 = scmp.ne.s32.totalorder %s19, %s20
      %p32 = scmp.eq.s32.totalorder %s15, 1
      %p33 = por %p31, %p32
      %p35 = scmp.ne.s32.totalorder %s20, %s34
      %p36 = scmp.eq.s32.totalorder %s15, 0
      %p37 = por %p35, %p36
      %s39 = sadd.s32 %s38, 1
      %p42 = scmp.eq.s32.totalorder %s9, 1
      %p43 = scmp.ne.s32.totalorder %s38, %s40
      %p44 = scmp.eq.s32.totalorder %s9, 0
      %p45 = por %p43, %p44
      %p46 = scmp.ne.s32.totalorder %s38, %s40
      %p47 = scmp.eq.s32.totalorder %s14, 1
      %p48 = por %p46, %p47
      %p49 = scmp.ne.s32.totalorder %s40, %s41
      %p50 = scmp.eq.s32.totalorder %s14, 0
      %p51 = por %p49, %p50
      %p52 = scmp.ne.s32.totalorder %s40, %s41
      %p53 = scmp.eq.s32.totalorder %s15, 1
      %p54 = por %p52, %p53
      %p56 = scmp.ne.s32.totalorder %s41, %s55
      %p57 = scmp.eq.s32.totalorder %s15, 0
      %p58 = por %p56, %p57
      %s59 = ssub.s32 %s9, %s16
      %p60 = scmp.eq.s32.totalorder %s59, 0
      %s62 = sadd.s32 %s61, 1
      %s63 = scalar_select %p60, %s61, %s62
      %p66 = pneg %p60
      %p67 = scmp.eq.s32.totalorder %s9, 1
      %p68 = por %p66, %p67
      %p69 = scmp.ne.s32.totalorder %s61, %s64
      %p70 = scmp.eq.s32.totalorder %s9, 0
      %p71 = por %p69, %p70
      %p72 = scmp.ne.s32.totalorder %s61, %s64
      %p73 = scmp.eq.s32.totalorder %s14, 1
      %p74 = por %p72, %p73
      %p75 = scmp.ne.s32.totalorder %s64, %s65
      %p76 = scmp.eq.s32.totalorder %s14, 0
      %p77 = por %p75, %p76
      %p78 = scmp.ne.s32.totalorder %s64, %s65
      %p79 = scmp.eq.s32.totalorder %s15, 1
      %p80 = por %p78, %p79
      %p82 = scmp.ne.s32.totalorder %s65, %s81
      %p83 = scmp.eq.s32.totalorder %s15, 0
      %p84 = por %p82, %p83
      %s85 = ssub.s32 %s9, %s16
      %p86 = scmp.eq.s32.totalorder %s85, 0
      %s88 = sadd.s32 %s87, 1
      %s89 = scalar_select %p86, %s87, %s88
      %p92 = pneg %p86
      %p93 = scmp.eq.s32.totalorder %s9, 1
      %p94 = por %p92, %p93
      %p95 = scmp.ne.s32.totalorder %s87, %s90
      %p96 = scmp.eq.s32.totalorder %s9, 0
      %p97 = por %p95, %p96
      %p98 = scmp.ne.s32.totalorder %s87, %s90
      %p99 = scmp.eq.s32.totalorder %s14, 1
      %p100 = por %p98, %p99
      %p101 = scmp.ne.s32.totalorder %s90, %s91
      %p102 = scmp.eq.s32.totalorder %s14, 0
      %p103 = por %p101, %p102
      %p104 = scmp.ne.s32.totalorder %s90, %s91
      %p105 = scmp.eq.s32.totalorder %s15, 1
      %p106 = por %p104, %p105
      %p108 = scmp.ne.s32.totalorder %s91, %s107
      %p109 = scmp.eq.s32.totalorder %s15, 0
      %p110 = por %p108, %p109
      %p111 = scmp.le.s32.totalorder 1, %s9
      %p112 = scmp.lt.s32.totalorder %s9, 3
      %p113 = pnand %p111, %p112
      %p114 = pneg %p113
      // Predicated region
      $region9: #{pattern_a_forward.1} parent=5 // pred_check
        _
      $region10: #{pattern_a_forward.1} parent=5 // pred_check_branch
        %116 = sbr.rel (%p113) target = $region12
      $region11: #{pattern_a_forward.1} parent=5 // pred_region
        %s117 = ssub.s32 %s9, 1
        // Predicated region
        $region13: #{pattern_a_forward.1} parent=11 // pred_check
          %p118 = pneg %p30
        $region14: #{pattern_a_forward.1} parent=11 // pred_check_branch
          %120 = sbr.rel (%p118) target = $region16
        $region15: #{pattern_a_forward.1} parent=11 // pred_region
          _
        $region16: #{pattern_a_forward.1} parent=11 // pred_fallthru
          _
        // Predicated region
        $region17: #{pattern_a_forward.1} parent=11 // pred_check
          %p121 = pneg %p51
        $region18: #{pattern_a_forward.1} parent=11 // pred_check_branch
          %123 = sbr.rel (%p121) target = $region20
        $region19: #{pattern_a_forward.1} parent=11 // pred_region
          _
        $region20: #{pattern_a_forward.1} parent=11 // pred_fallthru
          _
      $region12: #{pattern_a_forward.1} parent=5 // pred_fallthru
        _
      %p124 = scmp.lt.s32.totalorder %s9, 2
      // Predicated region
      $region21: #{pattern_a_forward.1} parent=5 // pred_check
        %p125 = pneg %p124
      $region22: #{pattern_a_forward.1} parent=5 // pred_check_branch
        %127 = sbr.rel (%p125) target = $region24
      $region23: #{pattern_a_forward.1} parent=5 // pred_region
        // Predicated region
        $region25: #{pattern_a_forward.1} parent=23 // pred_check
          %p128 = pneg %p71
        $region26: #{pattern_a_forward.1} parent=23 // pred_check_branch
          %130 = sbr.rel (%p128) target = $region28
        $region27: #{pattern_a_forward.1} parent=23 // pred_region
          %s131 = sand.u32 %s61, 1
          %s132 = sand.u32 %s61, 1
          %s133 = smul.addr %s132, 64
          %s134 = scalar_lea.vmem [#allocation2], %s133
          %s135 = smul.u32 2, %s9
          %s136 = smul.addr %s135, 8
          %s137 = scalar_lea.vmem %s2, %s136
          // Predicated region
          $region29: #{pattern_a_forward.1} parent=27 // pred_check
            _
          $region30: #{pattern_a_forward.1} parent=27 // pred_check_branch
            %139 = sbr.rel (0) target = $region32
          $region31: #{pattern_a_forward.1} parent=27 // pred_region
            // Predicated region
            $region33: #{pattern_a_forward.1} parent=31 // pred_check
              _
            $region34: #{pattern_a_forward.1} parent=31 // pred_check_branch
              %141 = sbr.rel (0) target = $region36
            $region35: #{pattern_a_forward.1} parent=31 // pred_region
              loop: start=0, step=1, limit=1
              $region37: #{pattern_a_forward.1} parent=35 // loop_pre_header
                _
              $region38: #{pattern_a_forward.1} parent=35 // loop_header
                %s143 = sphi 0, %s147
                %p144 = scmp.ge.s32.totalorder %s143, 1
                %s148 = sphi %s137, %s137
                %s149 = sphi %s134, %s134
              $region39: #{pattern_a_forward.1} parent=35 // loop_header_branch
                %146 = sbr.rel (%p144) target = $region43
              $region40: #{pattern_a_forward.1} parent=35 // loop_body
                %v150 = vld [vmem:[%s148] sm:$0xff]
                %151 = vst [vmem:[%s149] sm:$0xff] %v150
                %v152 = vld [vmem:[%s148 + $0x8] sm:$0xff]
                %153 = vst [vmem:[%s149 + $0x8] sm:$0xff] %v152
                %v154 = vld [vmem:[%s148 + $0x20] sm:$0xff]
                %155 = vst [vmem:[%s149 + $0x10] sm:$0xff] %v154
                %v156 = vld [vmem:[%s148 + $0x28] sm:$0xff]
                %157 = vst [vmem:[%s149 + $0x18] sm:$0xff] %v156
                %v158 = vld [vmem:[%s148 + $0x40] sm:$0xff]
                %159 = vst [vmem:[%s149 + $0x20] sm:$0xff] %v158
                %v160 = vld [vmem:[%s148 + $0x48] sm:$0xff]
                %161 = vst [vmem:[%s149 + $0x28] sm:$0xff] %v160
                %v162 = vld [vmem:[%s148 + $0x60] sm:$0xff]
                %163 = vst [vmem:[%s149 + $0x30] sm:$0xff] %v162
                %v164 = vld [vmem:[%s148 + $0x68] sm:$0xff]
                %165 = vst [vmem:[%s149 + $0x38] sm:$0xff] %v164
              $region41: #{pattern_a_forward.1} parent=35 // loop_footer
                %s147 = sadd.s32 1, %s143
              $region42: #{pattern_a_forward.1} parent=35 // loop_footer_branch
                %142 = sbr.rel target = $region38
              $region43: #{pattern_a_forward.1} parent=35 // loop_exit
                _
            $region36: #{pattern_a_forward.1} parent=31 // pred_fallthru
              _
            // Predicated region
            $region44: #{pattern_a_forward.1} parent=31 // pred_check
              _
            $region45: #{pattern_a_forward.1} parent=31 // pred_check_branch
              %167 = sbr.rel target = $region47
            $region46: #{pattern_a_forward.1} parent=31 // pred_region
              _
            $region47: #{pattern_a_forward.1} parent=31 // pred_fallthru
              _
          $region32: #{pattern_a_forward.1} parent=27 // pred_fallthru
            _
          %168 = vnop
        $region28: #{pattern_a_forward.1} parent=23 // pred_fallthru
          _
      $region24: #{pattern_a_forward.1} parent=5 // pred_fallthru
        _
      %p169 = scmp.le.s32.totalorder 1, %s9
      %p170 = scmp.lt.s32.totalorder %s9, 3
      %p171 = pnand %p169, %p170
      %p172 = pneg %p171
      // Predicated region
      $region48: #{pattern_a_forward.1} parent=5 // pred_check
        _
      $region49: #{pattern_a_forward.1} parent=5 // pred_check_branch
        %174 = sbr.rel (%p171) target = $region51
      $region50: #{pattern_a_forward.1} parent=5 // pred_region
        %s175 = ssub.s32 %s9, 1
        %s176 = sand.u32 %s64, 1
        %s177 = sand.u32 %s64, 1
        %s178 = smul.addr %s177, 64
        %s179 = scalar_lea.vmem [#allocation2], %s178
        // Predicated region
        $region52: #{pattern_a_forward.1} parent=50 // pred_check
          %p180 = pneg %p77
        $region53: #{pattern_a_forward.1} parent=50 // pred_check_branch
          %182 = sbr.rel (%p180) target = $region55
        $region54: #{pattern_a_forward.1} parent=50 // pred_region
          _
        $region55: #{pattern_a_forward.1} parent=50 // pred_fallthru
          _
        %p183 = pneg %p30
        %p184 = pneg %p27
        %p185 = pneg %p51
        %p186 = pneg %p48
        %s187 = sand.u32 %s64, 1
        %s188 = sand.u32 %s64, 1
        %s189 = smul.addr %s188, 64
        %s190 = scalar_lea.vmem [#allocation2], %s189
        %p191 = pneg %p77
        %p192 = pneg %p74
        %p193 = pneg %p103
        %p194 = pneg %p100
        %s195 = sand.u32 %s90, 1
        %s196 = sand.u32 %s90, 1
        %s197 = smul.addr %s196, 64
        %s198 = scalar_lea.vmem [#allocation3], %s197
        %s199 = smul.u32 2, %s14
        %s200 = smul.u32 2, %s14
        %v201 = vld [vmem:[%s0] sm:$0xff]
        %v202 = vld [vmem:[%s0 + $0x8] sm:$0xff]
        %v203 = vld [vmem:[%s0 + $0x10] sm:$0xff]
        %v204 = vld [vmem:[%s0 + $0x18] sm:$0xff]
        %v205 = vld [vmem:[%s179] sm:$0xff]
        %v206 = vld [vmem:[%s179 + $0x8] sm:$0xff]
        %v207 = vld [vmem:[%s179 + $0x10] sm:$0xff]
        %v208 = vld [vmem:[%s179 + $0x18] sm:$0xff]
        %v209 = vld [vmem:[%s179 + $0x20] sm:$0xff]
        %v210 = vld [vmem:[%s179 + $0x28] sm:$0xff]
        %v211 = vld [vmem:[%s179 + $0x30] sm:$0x7]
        %v212 = vld [vmem:[%s179 + $0x38] sm:$0x7]
        %v213 = vld [vmem:[%s1] sm:$0xff]
        %v214 = vld [vmem:[%s1 + $0x8] sm:$0xff]
        %v215 = vld [vmem:[%s1 + $0x10] sm:$0xff]
        %v216 = vld [vmem:[%s1 + $0x18] sm:$0xff]
        %218 = vset.pattern.permute.xlu0 0
        %219 = vperm.xlu0 %218, %v213
        %v220 = vpop.permute.xlu0 %219
        %223 = vset.pattern.permute.xlu0 0
        %224 = vperm.xlu0 %223, %v214
        %v225 = vpop.permute.xlu0 %224
        %228 = vset.pattern.permute.xlu0 0
        %229 = vperm.xlu0 %228, %v215
        %v230 = vpop.permute.xlu0 %229
        %233 = vset.pattern.permute.xlu0 0
        %234 = vperm.xlu0 %233, %v216
        %v235 = vpop.permute.xlu0 %234
        %vm237 = vcmask 220160
        %v239 = vsel %vm237, %v201, 0
        %v242 = vsel %vm237, %v202, 0
        %v245 = vsel %vm237, %v203, 0
        %v248 = vsel %vm237, %v204, 0
        %vm250 = vcmask 1042432
        %v252 = vsel %vm250, %v211, 0
        %v255 = vsel %vm250, %v212, 0
        %257 = vmatprep.subr.mxu0 %v206
        %258 = vmatpush1.msra.mxu0 %v205
        %259 = vmatprep.subr.mxu0 %v208
        %260 = vmatpush1.msra.mxu0 %v207
        %261 = vmatprep.subr.mxu0 %v210
        %262 = vmatpush1.msra.mxu0 %v209
        %263 = vmatprep.subr.mxu0 %v255
        %264 = vmatpush1.msra.mxu0 %v252
        %265 = vmatprep.subr.mxu0 0.0
        %266 = vmatpush1.msra.mxu0 0.0
        %267 = vmatprep.subr.mxu0 0.0
        %268 = vmatpush1.msra.mxu0 0.0
        %269 = vmatprep.subr.mxu0 0.0
        %270 = vmatpush1.msra.mxu0 0.0
        %271 = vmatprep.subr.mxu0 0.0
        %272 = vmatpush1.msra.mxu0 0.0
        %273 = vmatprep.subr.mxu0 0.0
        %274 = vmatpush1.msra.mxu0 0.0
        %275 = vmatprep.subr.mxu0 0.0
        %276 = vmatpush1.msra.mxu0 0.0
        %277 = vmatprep.subr.mxu0 0.0
        %278 = vmatpush1.msra.mxu0 0.0
        %279 = vmatprep.subr.mxu0 0.0
        %280 = vmatpush1.msra.mxu0 0.0
        %281 = vmatprep.subr.mxu0 0.0
        %282 = vmatpush1.msra.mxu0 0.0
        %283 = vmatprep.subr.mxu0 0.0
        %284 = vmatpush1.msra.mxu0 0.0
        %285 = vmatprep.subr.mxu0 0.0
        %286 = vmatpush1.msra.mxu0 0.0
        %287 = vmatprep.subr.mxu0 0.0
        %288 = vmatpush1.msra.mxu0 0.0
        %289 = vmatprep.subr.mxu0 0.0
        %290 = vmatpush1.msra.mxu0 0.0
        %291 = vmatprep.subr.mxu0 0.0
        %292 = vmatpush1.msra.mxu0 0.0
        %293 = vmatprep.subr.mxu0 0.0
        %294 = vmatpush1.msra.mxu0 0.0
        %295 = vmatprep.subr.mxu0 0.0
        %296 = vmatpush1.msra.mxu0 0.0
        %297 = vmatprep.subr.mxu0 0.0
        %298 = vmatpush1.msra.mxu0 0.0
        %299 = vmatprep.subr.mxu0 0.0
        %300 = vmatpush1.msra.mxu0 0.0
        %301 = vmatprep.subr.mxu0 0.0
        %302 = vmatpush1.msra.mxu0 0.0
        %303 = vmatprep.subr.mxu0 0.0
        %304 = vmatpush1.msra.mxu0 0.0
        %305 = vmatprep.subr.mxu0 0.0
        %306 = vmatpush1.msra.mxu0 0.0
        %307 = vmatprep.subr.mxu0 0.0
        %308 = vmatpush1.msra.mxu0 0.0
        %309 = vmatprep.subr.mxu0 0.0
        %310 = vmatpush1.msra.mxu0 0.0
        %311 = vmatprep.subr.mxu0 0.0
        %312 = vmatpush1.msra.mxu0 0.0
        %313 = vmatprep.subr.mxu0 0.0
        %314 = vmatpush1.msra.mxu0 0.0
        %315 = vmatprep.subr.mxu0 0.0
        %316 = vmatpush1.msra.mxu0 0.0
        %317 = vmatprep.subr.mxu0 0.0
        %318 = vmatpush1.msra.mxu0 0.0
        %319 = vmatprep.subr.mxu0 0.0
        %320 = vmatpush1.msra.mxu0 0.0
        %321 = vmatprep.mubr.f32.mxu0 0.0
        %322 = vmatmul.mubr.f32.gmra.mrb[0].mxu0 %v239
        %v323 = vpop.f32.mrb[0].mxu0
        %v324 = vadd.f32 %v220, %v323
        %v325 = vpop.f32.mrb[0].mxu0
        %v326 = vadd.f32 %v220, %v325
        %327 = vmatprep.mubr.f32.mxu0 0.0
        %328 = vmatmul.mubr.f32.gmra.mrb[0].mxu0 %v242
        %v329 = vpop.f32.mrb[0].mxu0
        %v330 = vadd.f32 %v225, %v329
        %v331 = vpop.f32.mrb[0].mxu0
        %v332 = vadd.f32 %v225, %v331
        %333 = vmatprep.mubr.f32.mxu0 0.0
        %334 = vmatmul.mubr.f32.gmra.mrb[0].mxu0 %v245
        %v335 = vpop.f32.mrb[0].mxu0
        %v336 = vadd.f32 %v230, %v335
        %v337 = vpop.f32.mrb[0].mxu0
        %v338 = vadd.f32 %v230, %v337
        %339 = vmatprep.mubr.f32.mxu0 0.0
        %340 = vmatmul.mubr.f32.gmra.mrb[0].mxu0 %v248
        %v341 = vpop.f32.mrb[0].mxu0
        %v342 = vadd.f32 %v235, %v341
        %v343 = vpop.f32.mrb[0].mxu0
        %v344 = vadd.f32 %v235, %v343
        %345 = vdwg.mxu0
        %346 = vst [vmem:[%s198] sm:$0xff] %v324
        %347 = vst [vmem:[%s198 + $0x8] sm:$0xff] %v326
        %348 = vst [vmem:[%s198 + $0x10] sm:$0xff] %v330
        %349 = vst [vmem:[%s198 + $0x18] sm:$0xff] %v332
        %350 = vst [vmem:[%s198 + $0x20] sm:$0xff] %v336
        %351 = vst [vmem:[%s198 + $0x28] sm:$0xff] %v338
        %352 = vst [vmem:[%s198 + $0x30] sm:$0xff] %v342
        %353 = vst [vmem:[%s198 + $0x38] sm:$0xff] %v344
        %s354 = sand.u32 %s90, 1
        %s355 = sand.u32 %s90, 1
        %s356 = smul.addr %s355, 64
        %s357 = scalar_lea.vmem [#allocation3], %s356
        // Predicated region
        $region56: #{pattern_a_forward.1} parent=50 // pred_check
          %p358 = pneg %p100
        $region57: #{pattern_a_forward.1} parent=50 // pred_check_branch
          %360 = sbr.rel (%p358) target = $region59
        $region58: #{pattern_a_forward.1} parent=50 // pred_region
          %s361 = smul.u32 2, %s14
          %s362 = smul.addr %s361, 8
          %s363 = scalar_lea.vmem %s3, %s362
          // Predicated region
          $region60: #{pattern_a_forward.1} parent=58 // pred_check
            _
          $region61: #{pattern_a_forward.1} parent=58 // pred_check_branch
            %365 = sbr.rel (0) target = $region63
          $region62: #{pattern_a_forward.1} parent=58 // pred_region
            // Predicated region
            $region64: #{pattern_a_forward.1} parent=62 // pred_check
              _
            $region65: #{pattern_a_forward.1} parent=62 // pred_check_branch
              %367 = sbr.rel (0) target = $region67
            $region66: #{pattern_a_forward.1} parent=62 // pred_region
              loop: start=0, step=1, limit=1
              $region68: #{pattern_a_forward.1} parent=66 // loop_pre_header
                _
              $region69: #{pattern_a_forward.1} parent=66 // loop_header
                %s369 = sphi 0, %s373
                %p370 = scmp.ge.s32.totalorder %s369, 1
                %s374 = sphi %s357, %s357
                %s375 = sphi %s363, %s363
              $region70: #{pattern_a_forward.1} parent=66 // loop_header_branch
                %372 = sbr.rel (%p370) target = $region74
              $region71: #{pattern_a_forward.1} parent=66 // loop_body
                %v376 = vld [vmem:[%s374] sm:$0xff]
                %377 = vst [vmem:[%s375] sm:$0xff] %v376
                %v378 = vld [vmem:[%s374 + $0x8] sm:$0xff]
                %379 = vst [vmem:[%s375 + $0x8] sm:$0xff] %v378
                %v380 = vld [vmem:[%s374 + $0x10] sm:$0xff]
                %381 = vst [vmem:[%s375 + $0x20] sm:$0xff] %v380
                %v382 = vld [vmem:[%s374 + $0x18] sm:$0xff]
                %383 = vst [vmem:[%s375 + $0x28] sm:$0xff] %v382
                %v384 = vld [vmem:[%s374 + $0x20] sm:$0xff]
                %385 = vst [vmem:[%s375 + $0x40] sm:$0xff] %v384
                %v386 = vld [vmem:[%s374 + $0x28] sm:$0xff]
                %387 = vst [vmem:[%s375 + $0x48] sm:$0xff] %v386
                %v388 = vld [vmem:[%s374 + $0x30] sm:$0xff]
                %389 = vst [vmem:[%s375 + $0x60] sm:$0xff] %v388
                %v390 = vld [vmem:[%s374 + $0x38] sm:$0xff]
                %391 = vst [vmem:[%s375 + $0x68] sm:$0xff] %v390
              $region72: #{pattern_a_forward.1} parent=66 // loop_footer
                %s373 = sadd.s32 1, %s369
              $region73: #{pattern_a_forward.1} parent=66 // loop_footer_branch
                %368 = sbr.rel target = $region69
              $region74: #{pattern_a_forward.1} parent=66 // loop_exit
                _
            $region67: #{pattern_a_forward.1} parent=62 // pred_fallthru
              _
            // Predicated region
            $region75: #{pattern_a_forward.1} parent=62 // pred_check
              _
            $region76: #{pattern_a_forward.1} parent=62 // pred_check_branch
              %393 = sbr.rel target = $region78
            $region77: #{pattern_a_forward.1} parent=62 // pred_region
              _
            $region78: #{pattern_a_forward.1} parent=62 // pred_fallthru
              _
          $region63: #{pattern_a_forward.1} parent=58 // pred_fallthru
            _
          %394 = vnop
        $region59: #{pattern_a_forward.1} parent=50 // pred_fallthru
          _
      $region51: #{pattern_a_forward.1} parent=5 // pred_fallthru
        _
      %p395 = scmp.le.s32.totalorder 2, %s9
      // Predicated region
      $region79: #{pattern_a_forward.1} parent=5 // pred_check
        %p396 = pneg %p395
      $region80: #{pattern_a_forward.1} parent=5 // pred_check_branch
        %398 = sbr.rel (%p396) target = $region82
      $region81: #{pattern_a_forward.1} parent=5 // pred_region
        %s399 = ssub.s32 %s9, 2
        // Predicated region
        $region83: #{pattern_a_forward.1} parent=81 // pred_check
          %p400 = pneg %p106
        $region84: #{pattern_a_forward.1} parent=81 // pred_check_branch
          %402 = sbr.rel (%p400) target = $region86
        $region85: #{pattern_a_forward.1} parent=81 // pred_region
          %s403 = sand.u32 %s91, 1
          %s404 = sand.u32 %s91, 1
          %s405 = smul.addr %s404, 64
          %s406 = scalar_lea.vmem [#allocation3], %s405
        $region86: #{pattern_a_forward.1} parent=81 // pred_fallthru
          _
      $region82: #{pattern_a_forward.1} parent=5 // pred_fallthru
        _
    $region6: #{pattern_a_forward.1} parent=1 // loop_footer
      %s13 = sadd.s32 1, %s9
    $region7: #{pattern_a_forward.1} parent=1 // loop_footer_branch
      %8 = sbr.rel target = $region3
    $region8: #{pattern_a_forward.1} parent=1 // loop_exit
      _

</llo_original>
